<compile_context>
chip_gen: v5e
topology: v5e:2x2
jax: 0.10.0
libtpu: 0.0.40
codegen_flags: <defaults>
</compile_context>

<pallas_src>
import functools
from math import sqrt

import jax
import jax.numpy as jnp
from jax import lax
from jax.experimental import pallas as pl
from jax.experimental.pallas import tpu as pltpu


def _mosaic_params(semantics, block_bytes):
    """CompilerParams with an explicit VMEM budget (double-buffered + headroom)."""
    need = 2 * int(sum(block_bytes))                  # BlockSpec double-buffers
    limit = min(100 << 20, max(32 << 20, int(need * 1.25)))
    return pltpu.CompilerParams(dimension_semantics=semantics,
                                vmem_limit_bytes=limit)


# ----------------------------------------------------------------------------
# Kernel 1: (M, N)-tiled linear projection  y = x @ W + b
# ----------------------------------------------------------------------------
def linear_kernel(x_ref, w_ref, b_ref, o_ref, *, x_cast_dtype):
    x = x_ref[...]                                    # (TM, K)
    if x_cast_dtype is not None:
        x = x.astype(x_cast_dtype)                    # single full-tile cast
    y = jnp.dot(x, w_ref[...], preferred_element_type=jnp.float32) + b_ref[...]
    o_ref[...] = y.astype(o_ref.dtype)


def pallas_linear(x, w, b, *, block_m=512, block_n=2048, x_cast_dtype=None):
    """x: (M, K), w: (K, N) (may be pre-cast to bf16), b: (N,) -> (M, N) in x.dtype.

    Tiled over rows (M) and output columns (N); activation tile is reused across
    the N axis, the weight tile across the M axis.  Out-of-bounds final tiles
    are masked on store by Pallas.
    """
    M, K = x.shape
    _, N = w.shape
    b2 = b.reshape(1, N).astype(jnp.float32)          # bias added in f32
    tm = min(block_m, M)
    tn = min(block_n, N)
    grid = (pl.cdiv(M, tm), pl.cdiv(N, tn))

    xb = jnp.dtype(x.dtype).itemsize
    wb = jnp.dtype(w.dtype).itemsize
    block_bytes = [tm * K * xb, K * tn * wb, tn * 4, tm * tn * xb]

    kernel = functools.partial(linear_kernel, x_cast_dtype=x_cast_dtype)
    return pl.pallas_call(
        kernel,
        out_shape=jax.ShapeDtypeStruct((M, N), x.dtype),
        grid=grid,
        in_specs=[
            pl.BlockSpec((tm, K), lambda i, j: (i, 0)),   # activation row tile
            pl.BlockSpec((K, tn), lambda i, j: (0, j)),   # weight column tile
            pl.BlockSpec((1, tn), lambda i, j: (0, j)),   # bias column tile
        ],
        out_specs=pl.BlockSpec((tm, tn), lambda i, j: (i, j)),
        compiler_params=_mosaic_params(("parallel", "parallel"), block_bytes),
    )(x, w, b2)


# ----------------------------------------------------------------------------
# Kernel 2: multi-head scaled dot-product attention.
# Grid = (B, L-tiles); all H heads processed per step, K/V resident across the
# L axis.  Inputs in natural (B, L, H*D) layout; output written directly in the
# PyTorch (B, L, H, Dv).view(B, L, -1) layout with ONE lane-dense store.
# ----------------------------------------------------------------------------
def attention_kernel(q_ref, k_ref, v_ref, o_ref, a_ref=None, *,
                     H, Dk, Dv, scale, operand_dtype):
    mm_dtype = operand_dtype if operand_dtype is not None else q_ref.dtype

    # Hoisted: one full-width scale + cast pass per tensor (not per head).
    q = (q_ref[0] * scale).astype(mm_dtype)          # (TL, H*Dk)
    k = k_ref[0].astype(mm_dtype)                    # (S,  H*Dk)
    v = v_ref[0].astype(mm_dtype)                    # (S,  H*Dv)

    outs = []
    for h in range(H):                               # static unroll; H is small
        qh = q[:, h * Dk:(h + 1) * Dk]               # (TL, Dk)
        kh = k[:, h * Dk:(h + 1) * Dk]               # (S,  Dk)
        vh = v[:, h * Dv:(h + 1) * Dv]               # (S,  Dv)

        # s = qh @ kh^T (contract Dk); f32 accumulate on the MXU.
        s = lax.dot_general(qh, kh, (((1,), (1,)), ((), ())),
                            preferred_element_type=jnp.float32)   # (TL, S)
        s = s - jnp.max(s, axis=-1, keepdims=True)
        p = jnp.exp(s)
        denom = jnp.sum(p, axis=-1, keepdims=True)
        if a_ref is None:
            # Fast path: approx reciprocal runs on the EUP (free slot).
            p = p * pl.reciprocal(denom, approx=True)
        else:
            p = p / denom                            # exact: probs sum to 1
            a_ref[0, h] = p.astype(a_ref.dtype)      # lane-dense (TL, S) store

        outs.append(jnp.dot(p.astype(mm_dtype), vh,
                            preferred_element_type=jnp.float32))  # (TL, Dv)

    # Single lane-dense store of width H*Dv (== d_model, multiple of 128 for
    # realistic configs) instead of H masked partial stores.
    o_ref[0] = jnp.concatenate(outs, axis=-1).astype(o_ref.dtype)


def pallas_attention(q, k, v, *, n_heads, return_attn=True, operand_dtype=None,
                     block_l=256):
    """q: (B, L, H*Dk), k: (B, S, H*Dk), v: (B, S, H*Dv)
    -> out (B, L, H*Dv)[, attn (B, H, L, S)]"""
    B, L, HDk = q.shape
    _, S, _ = k.shape
    HDv = v.shape[2]
    H = n_heads
    Dk = HDk // H
    Dv = HDv // H
    scale = 1.0 / sqrt(Dk)

    tl = min(block_l, L)                 # block_l multiple of 8; tl==L otherwise
    grid_l = pl.cdiv(L, tl)

    kernel = functools.partial(attention_kernel, H=H, Dk=Dk, Dv=Dv,
                               scale=scale, operand_dtype=operand_dtype)

    out_shape = jax.ShapeDtypeStruct((B, L, HDv), q.dtype)
    out_spec = pl.BlockSpec((1, tl, HDv), lambda b, l: (b, l, 0))
    block_bytes = [tl * HDk * 4, S * HDk * 4, S * HDv * 4, tl * HDv * 4]
    if return_attn:
        out_shape = (out_shape, jax.ShapeDtypeStruct((B, H, L, S), jnp.float32))
        out_spec = (out_spec,
                    pl.BlockSpec((1, H, tl, S), lambda b, l: (b, 0, l, 0)))
        block_bytes.append(H * tl * S * 4)

    result = pl.pallas_call(
        kernel,
        out_shape=out_shape,
        grid=(B, grid_l),
        in_specs=[
            pl.BlockSpec((1, tl, HDk), lambda b, l: (b, l, 0)),   # q L-tile
            pl.BlockSpec((1, S, HDk), lambda b, l: (b, 0, 0)),    # K resident
            pl.BlockSpec((1, S, HDv), lambda b, l: (b, 0, 0)),    # V resident
        ],
        out_specs=out_spec,
        compiler_params=_mosaic_params(("parallel", "parallel"), block_bytes),
    )(q, k, v)

    if return_attn:
        return result
    return result, None


# ----------------------------------------------------------------------------
# AttentionLayer forward (glue in plain JAX, hot path in Pallas)
# ----------------------------------------------------------------------------
def attention_layer_forward(params, queries, keys, values, attn_mask=None,
                            n_heads=4, mix=False, return_attn=True,
                            operand_dtype=jnp.bfloat16):
    B, L, _ = queries.shape
    _, S, _ = keys.shape
    H = n_heads

    d_q = params["wq"].shape[1]
    d_k = params["wk"].shape[1]
    d_v = params["wv"].shape[1]

    def cast_w(w):
        # Pre-cast weights once (halves weight DMA + resident VMEM footprint).
        return w if operand_dtype is None else w.astype(operand_dtype)

    # --- Projections (fused when inputs alias: one activation read from HBM) --
    if (queries is keys) and (keys is values):
        w_qkv = cast_w(jnp.concatenate([params["wq"], params["wk"], params["wv"]],
                                       axis=1))
        b_qkv = jnp.concatenate([params["bq"], params["bk"], params["bv"]], axis=0)
        qkv = pallas_linear(queries.reshape(B * L, -1), w_qkv, b_qkv,
                            x_cast_dtype=operand_dtype)
        q = qkv[:, :d_q]
        k = qkv[:, d_q:d_q + d_k]
        v = qkv[:, d_q + d_k:]
    elif keys is values:
        q = pallas_linear(queries.reshape(B * L, -1), cast_w(params["wq"]),
                          params["bq"], x_cast_dtype=operand_dtype)
        w_kv = cast_w(jnp.concatenate([params["wk"], params["wv"]], axis=1))
        b_kv = jnp.concatenate([params["bk"], params["bv"]], axis=0)
        kv = pallas_linear(keys.reshape(B * S, -1), w_kv, b_kv,
                           x_cast_dtype=operand_dtype)
        k = kv[:, :d_k]
        v = kv[:, d_k:]
    else:
        q = pallas_linear(queries.reshape(B * L, -1), cast_w(params["wq"]),
                          params["bq"], x_cast_dtype=operand_dtype)
        k = pallas_linear(keys.reshape(B * S, -1), cast_w(params["wk"]),
                          params["bk"], x_cast_dtype=operand_dtype)
        v = pallas_linear(values.reshape(B * S, -1), cast_w(params["wv"]),
                          params["bv"], x_cast_dtype=operand_dtype)

    Dk = d_q // H
    Dv = d_v // H
    # Natural layouts; these reshapes are contiguous views (no HBM transpose).
    q = q.reshape(B, L, H * Dk)
    k = k.reshape(B, S, H * Dk)
    v = v.reshape(B, S, H * Dv)

    # TODO(synk): attn_mask ignored (inner FullAttention with mask_flag=False).
    out, attn = pallas_attention(q, k, v, n_heads=H, return_attn=return_attn,
                                 operand_dtype=operand_dtype)
    # out is already (B, L, H*Dv) == PyTorch (B, L, H, Dv).view(B, L, -1).

    if mix:
        # PyTorch: out.transpose(2, 1).contiguous().view(B, L, -1)
        # TODO(synk): could be fused into the attention output store.
        out = out.reshape(B, L, H, Dv).transpose(0, 2, 1, 3).reshape(B, L, H * Dv)

    final = pallas_linear(out.reshape(B * L, -1), cast_w(params["wo"]),
                          params["bo"], x_cast_dtype=operand_dtype)
    return final.reshape(B, L, -1), attn


# ----------------------------------------------------------------------------
# Deterministic parameter init (matches nn.Linear shapes)
# ----------------------------------------------------------------------------
def init_params(key, d_model, n_heads):
    d_keys = d_model // n_heads
    d_values = d_model // n_heads
    ks = jax.random.split(key, 8)

    def linear_init(kw, kb, fan_in, fan_out):
        bound = 1.0 / sqrt(fan_in)
        w = jax.random.uniform(kw, (fan_in, fan_out), jnp.float32, -bound, bound)
        b = jax.random.uniform(kb, (fan_out,), jnp.float32, -bound, bound)
        return w, b

    wq, bq = linear_init(ks[0], ks[1], d_model, d_keys * n_heads)
    wk, bk = linear_init(ks[2], ks[3], d_model, d_keys * n_heads)
    wv, bv = linear_init(ks[4], ks[5], d_model, d_values * n_heads)
    wo, bo = linear_init(ks[6], ks[7], d_values * n_heads, d_model)
    return dict(wq=wq, bq=bq, wk=wk, bk=bk, wv=wv, bv=bv, wo=wo, bo=bo)


# ----------------------------------------------------------------------------
# Pure-JAX reference (for correctness check)
# ----------------------------------------------------------------------------
def reference_forward(params, queries, keys, values, n_heads, mix=False):
    B, L, _ = queries.shape
    _, S, _ = keys.shape
    H = n_heads
    q = queries @ params["wq"] + params["bq"]
    k = keys @ params["wk"] + params["bk"]
    v = values @ params["wv"] + params["bv"]
    Dk = q.shape[-1] // H
    Dv = v.shape[-1] // H
    q = q.reshape(B, L, H, Dk)
    k = k.reshape(B, S, H, Dk)
    v = v.reshape(B, S, H, Dv)
    scale = 1.0 / sqrt(Dk)
    scores = jnp.einsum("blhe,bshe->bhls", q, k) * scale
    attn = jax.nn.softmax(scores, axis=-1)
    out = jnp.einsum("bhls,bshd->blhd", attn, v)      # (B, L, H, Dv)
    if mix:
        out = out.transpose(0, 2, 1, 3)               # (B, H, L, Dv)
    out = out.reshape(B, L, -1)
    return out @ params["wo"] + params["bo"], attn


if __name__ == "__main__":
    B, L, S, d_model, n_heads = 2, 8, 8, 32, 4

    key = jax.random.PRNGKey(0)
    kq, kk, kv, kp = jax.random.split(key, 4)
    queries = jax.random.normal(kq, (B, L, d_model), jnp.float32)
    keys = jax.random.normal(kk, (B, S, d_model), jnp.float32)
    values = jax.random.normal(kv, (B, S, d_model), jnp.float32)
    params = init_params(kp, d_model, n_heads)

    # 1) f32-operand path (bit-tight): cross-attention, attn probs returned.
    out, attn = attention_layer_forward(
        params, queries, keys, values, attn_mask=None, n_heads=n_heads,
        mix=False, return_attn=True, operand_dtype=None)
    out = jax.block_until_ready(out)
    attn = jax.block_until_ready(attn)
    ref_out, ref_attn = reference_forward(params, queries, keys, values, n_heads)
    assert out.shape == (B, L, d_model)
    assert attn.shape == (B, n_heads, L, S)
    assert jnp.allclose(out, ref_out, atol=2e-3, rtol=2e-3)
    assert jnp.allclose(attn, ref_attn, atol=2e-3, rtol=2e-3)

    # 2) mix=True path, f32 operands (verifies head-mixing permutation).
    out_mix, _ = attention_layer_forward(
        params, queries, keys, values, attn_mask=None, n_heads=n_heads,
        mix=True, return_attn=True, operand_dtype=None)
    out_mix = jax.block_until_ready(out_mix)
    ref_mix, _ = reference_forward(params, queries, keys, values, n_heads, mix=True)
    assert jnp.allclose(out_mix, ref_mix, atol=2e-3, rtol=2e-3)

    # 3) Default bf16-operand fast path: fused QKV (self-attention), no attn
    #    writeback.  Looser tolerance vs the f32 reference (documented).
    out_sa, attn_sa = attention_layer_forward(
        params, queries, queries, queries, attn_mask=None, n_heads=n_heads,
        mix=False, return_attn=False)
    out_sa = jax.block_until_ready(out_sa)
    ref_sa, _ = reference_forward(params, queries, queries, queries, n_heads)
    assert attn_sa is None
    assert out_sa.shape == (B, L, d_model)
    assert jnp.allclose(out_sa, ref_sa, atol=3e-2, rtol=3e-2)

    print("KERNEL_OK")
</pallas_src>

<mosaic_0001>
module attributes {stable_mosaic.version = 11 : i64} {
  func.func @linear_kernel(%arg0: i32, %arg1: i32, %arg2: memref<16x32xf32, #tpu.memory_space<vmem>>, %arg3: memref<32x32xf32, #tpu.memory_space<vmem>>, %arg4: memref<1x32xf32, #tpu.memory_space<vmem>>, %arg5: memref<16x32xf32, #tpu.memory_space<vmem>>) attributes {dimension_semantics = [#tpu.dimension_semantics<parallel>, #tpu.dimension_semantics<parallel>], iteration_bounds = array<i64: 1, 1>, scalar_prefetch = 0 : i64, scratch_operands = 0 : i64, tpu.core_type = #tpu.core_type<tc>, window_params = [{transform_indices = @transform_0, window_bounds = array<i64: 16, 32>}, {transform_indices = @transform_1, window_bounds = array<i64: 32, 32>}, {transform_indices = @transform_2, window_bounds = array<i64: 1, 32>}, {transform_indices = @transform_3, window_bounds = array<i64: 16, 32>}]} {
    %c0 = arith.constant 0 : index
    %c0_0 = arith.constant 0 : index
    %0 = vector.load %arg2[%c0, %c0_0] : memref<16x32xf32, #tpu.memory_space<vmem>>, vector<16x32xf32>
    %c0_1 = arith.constant 0 : index
    %c0_2 = arith.constant 0 : index
    %1 = vector.load %arg3[%c0_1, %c0_2] : memref<32x32xf32, #tpu.memory_space<vmem>>, vector<32x32xf32>
    %cst = arith.constant dense<0.000000e+00> : vector<16x32xf32>
    %2 = tpu.matmul %0, %1, %cst {dimension_numbers = #tpu.dot_dimension_numbers<[1], [0], [0], [1], [0, 0, 1, 1], [], []>} : vector<16x32xf32>, vector<32x32xf32>, vector<16x32xf32> -> vector<16x32xf32>
    %c0_3 = arith.constant 0 : index
    %c0_4 = arith.constant 0 : index
    %3 = vector.load %arg4[%c0_3, %c0_4] : memref<1x32xf32, #tpu.memory_space<vmem>>, vector<1x32xf32>
    %4 = vector.broadcast %3 : vector<1x32xf32> to vector<16x32xf32>
    %5 = arith.addf %2, %4 : vector<16x32xf32>
    %c0_5 = arith.constant 0 : index
    %c0_6 = arith.constant 0 : index
    %6 = vector.load %arg5[%c0_5, %c0_6] : memref<16x32xf32, #tpu.memory_space<vmem>>, vector<16x32xf32>
    tpu.vector_store %arg5[%c0_5, %c0_6], %5 {strides = array<i32>} : memref<16x32xf32, #tpu.memory_space<vmem>>, vector<16x32xf32>,
    return
  }
  func.func @transform_0(%arg0: i32, %arg1: i32) -> (i32, i32) {
    %c0_i32 = arith.constant 0 : i32
    %c0_i32_0 = arith.constant 0 : i32
    return %arg0, %c0_i32 : i32, i32
  }
  func.func @transform_1(%arg0: i32, %arg1: i32) -> (i32, i32) {
    %c0_i32 = arith.constant 0 : i32
    %c0_i32_0 = arith.constant 0 : i32
    return %c0_i32, %arg1 : i32, i32
  }
  func.func @transform_2(%arg0: i32, %arg1: i32) -> (i32, i32) {
    %c0_i32 = arith.constant 0 : i32
    %c0_i32_0 = arith.constant 0 : i32
    return %c0_i32, %arg1 : i32, i32
  }
  func.func @transform_3(%arg0: i32, %arg1: i32) -> (i32, i32) {
    %c0_i32 = arith.constant 0 : i32
    return %arg0, %arg1 : i32, i32
  }
}

</mosaic_0001>

<llo_original>
// kernel: tpu_custom_call.1
$region0: #{tpu_custom_call.1}
  #allocation0 [shape = 'u32[]', space=smem, size = 0x4, offset = 0x4, fixed_abs, tag = 'smem constant byte address 0x4 - core index']
  #allocation1 [shape = 'u32[72,128]{1,0:T(1,128)}', space=vmem, size = 0x9000, scoped, tag = 'internal scratch']
  %s0 = inlined_call_operand.hbm [shape: f32[16,32], index: 0, kind: input, shape index: {}]
  %s1 = inlined_call_operand.hbm [shape: f32[32,32], index: 1, kind: input, shape index: {}]
  %s2 = inlined_call_operand.vmem [shape: f32[1,32], index: 2, kind: input, shape index: {}]
  %s3 = inlined_call_operand.hbm [shape: f32[16,32], index: 3, kind: output, shape index: {}]
  %s4 = sld [smem:[#allocation0]]
  $region30: #{tpu_custom_call.1} parent=0
    _
  %s6 = ssub.s32 1, %s4
  %s7 = scalar_select 0, %s6, %s4
  $region1: #{tpu_custom_call.1} parent=0
    #allocation2 [shape = 'u8[8192]{0}', space=vmem, size = 0x2000, scoped, tag = 'input window, operand 0, single buffered']
    #allocation3 [shape = 's32[1]{0}', space=sflag, size = 0x4, scoped, tag = 'scoped memory for tpu_custom_call.1']
    #allocation4 [shape = 's32[1]{0}', space=sflag, size = 0x4, scoped, tag = 'scoped memory for tpu_custom_call.1']
    #allocation5 [shape = 'u8[16384]{0}', space=vmem, size = 0x4000, scoped, tag = 'input window, operand 1, single buffered']
    #allocation6 [shape = 's32[1]{0}', space=sflag, size = 0x4, scoped, tag = 'scoped memory for tpu_custom_call.1']
    #allocation7 [shape = 'u8[8192]{0}', space=vmem, size = 0x2000, scoped, tag = 'output window, operand 0, single buffered']
    %8 = vsyncpa [#allocation3], 0
    %9 = vsyncpa [#allocation6], 0
    %10 = vsyncpa [#allocation4], 0
    // Predicated region
    $region2: #{tpu_custom_call.1} parent=1 // pred_check
      _
    $region3: #{tpu_custom_call.1} parent=1 // pred_check_branch
      %12 = sbr.rel (0) target = $region5
    $region4: #{tpu_custom_call.1} parent=1 // pred_region
      %14 = vsyncadd [#allocation3], 0
      %s15 = sshll.u32 %s0, 4
      %s16 = int_to_ptr.hbm [resolvable:$true] %s15
      %s17 = sshll.u32 [#allocation2], 4
      %s18 = int_to_ptr.vmem [resolvable:$true] %s17
      %23 = dma.hbm_to_vmem [thread:$0]  %s16, 256, %s18, [#allocation3], 128, 128, 8
    $region5: #{tpu_custom_call.1} parent=1 // pred_fallthru
      _
    // Predicated region
    $region6: #{tpu_custom_call.1} parent=1 // pred_check
      _
    $region7: #{tpu_custom_call.1} parent=1 // pred_check_branch
      %25 = sbr.rel (0) target = $region9
    $region8: #{tpu_custom_call.1} parent=1 // pred_region
      %27 = vsyncadd [#allocation6], 0
      %s28 = sshll.u32 %s1, 4
      %s29 = int_to_ptr.hbm [resolvable:$true] %s28
      %s30 = sshll.u32 [#allocation5], 4
      %s31 = int_to_ptr.vmem [resolvable:$true] %s30
      %36 = dma.hbm_to_vmem [thread:$0]  %s29, 512, %s31, [#allocation6], 128, 128, 8
    $region9: #{tpu_custom_call.1} parent=1 // pred_fallthru
      _
    // Predicated region
    $region10: #{tpu_custom_call.1} parent=1 // pred_check
      _
    $region11: #{tpu_custom_call.1} parent=1 // pred_check_branch
      %38 = sbr.rel (0) target = $region13
    $region12: #{tpu_custom_call.1} parent=1 // pred_region
      _
    $region13: #{tpu_custom_call.1} parent=1 // pred_fallthru
      _
    // Predicated region
    $region14: #{tpu_custom_call.1} parent=1 // pred_check
      _
    $region15: #{tpu_custom_call.1} parent=1 // pred_check_branch
      %40 = sbr.rel (0) target = $region17
    $region16: #{tpu_custom_call.1} parent=1 // pred_region
      %42 = dma.done [#allocation3], 256
    $region17: #{tpu_custom_call.1} parent=1 // pred_fallthru
      _
    // Predicated region
    $region18: #{tpu_custom_call.1} parent=1 // pred_check
      _
    $region19: #{tpu_custom_call.1} parent=1 // pred_check_branch
      %44 = sbr.rel (0) target = $region21
    $region20: #{tpu_custom_call.1} parent=1 // pred_region
      %46 = dma.done [#allocation6], 512
    $region21: #{tpu_custom_call.1} parent=1 // pred_fallthru
      _
    %v47 = vld [vmem:[#allocation2] sm:$0xff]
    %v48 = vld [vmem:[#allocation2 + $0x8] sm:$0xff]
    %v49 = vld [vmem:[#allocation5] sm:$0xff]
    %v50 = vld [vmem:[#allocation5 + $0x8] sm:$0xff]
    %v51 = vld [vmem:[#allocation5 + $0x10] sm:$0xff]
    %v52 = vld [vmem:[#allocation5 + $0x18] sm:$0xff]
    %v53 = vld [vmem:[%s2] sm:$0x1]
    %v55 = vperm.slane %v53, 0
    %vm57 = vcmask 261120
    %v59 = vsel %vm57, %v47, 0
    %v62 = vsel %vm57, %v48, 0
    %64 = vmatpush.msra.mxu0 0.0
    %65 = vmatpush.msra.mxu0 0.0
    %66 = vmatpush.msra.mxu0 0.0
    %67 = vmatpush.msra.mxu0 0.0
    %68 = vmatpush.msra.mxu0 0.0
    %69 = vmatpush.msra.mxu0 0.0
    %70 = vmatpush.msra.mxu0 0.0
    %71 = vmatpush.msra.mxu0 0.0
    %72 = vmatpush.msra.mxu0 0.0
    %73 = vmatpush.msra.mxu0 0.0
    %74 = vmatpush.msra.mxu0 0.0
    %75 = vmatpush.msra.mxu0 0.0
    %76 = vmatpush.msra.mxu0 %v52
    %77 = vmatpush.msra.mxu0 %v51
    %78 = vmatpush.msra.mxu0 %v50
    %79 = vmatpush.msra.mxu0 %v49
    %80 = vmatmul.f32.gmra.mxu0 %v59
    %v81 = vpop.f32.mrf.mxu0
    %v82 = vadd.f32 %v55, %v81
    %83 = vmatmul.f32.gmra.mxu0 %v62
    %v84 = vpop.f32.mrf.mxu0
    %v85 = vadd.f32 %v55, %v84
    %86 = vdwg.mxu0
    %87 = vst.msk [vmem:[#allocation7] sm:$0xff] %vm57, %v82
    %88 = vst.msk [vmem:[#allocation7 + $0x8] sm:$0xff] %vm57, %v85
    // Predicated region
    $region22: #{tpu_custom_call.1} parent=1 // pred_check
      _
    $region23: #{tpu_custom_call.1} parent=1 // pred_check_branch
      %90 = sbr.rel (0) target = $region25
    $region24: #{tpu_custom_call.1} parent=1 // pred_region
      %92 = vsyncadd [#allocation4], 0
      %s93 = sshll.u32 [#allocation7], 4
      %s94 = int_to_ptr.vmem [resolvable:$true] %s93
      %s95 = sshll.u32 %s3, 4
      %s96 = int_to_ptr.hbm [resolvable:$true] %s95
      %101 = dma.vmem_to_hbm [thread:$0]  %s94, 256, %s96, [#allocation4], 128, 128, 8
    $region25: #{tpu_custom_call.1} parent=1 // pred_fallthru
      _
    // Predicated region
    $region26: #{tpu_custom_call.1} parent=1 // pred_check
      _
    $region27: #{tpu_custom_call.1} parent=1 // pred_check_branch
      %103 = sbr.rel (0) target = $region29
    $region28: #{tpu_custom_call.1} parent=1 // pred_region
      %105 = dma.done [#allocation4], 256
    $region29: #{tpu_custom_call.1} parent=1 // pred_fallthru
      _
    %106 = vsyncpa [#allocation3], 1
    %107 = vsyncpa [#allocation6], 1
    %108 = vsyncpa [#allocation4], 1

</llo_original>
